<compile_context>
chip_gen: v7x
topology: tpu7x:2x2x1
jax: 0.10.0
libtpu: 0.0.40
codegen_flags: <defaults>
</compile_context>

<pallas_src>
import jax
import jax.numpy as jnp
from jax.experimental import pallas as pl
from jax.experimental.pallas import tpu as pltpu

EPS = 1e-5
_MIB = 1024 * 1024


# --------------------------------------------------------------------------
# helpers
# --------------------------------------------------------------------------
def _vmem_capacity_bytes():
    """Physical VMEM of the attached TPU; conservative fallback if unknown."""
    try:
        return int(pltpu.get_tpu_info().vmem_capacity_bytes)
    except Exception:
        return 64 * _MIB        # v7x per-TensorCore physical VMEM (smallest)


def _sublane_multiple(dtype):
    """Native sublane tiling: 8 for 4-byte, 16 for 2-byte, 32 for 1-byte."""
    return max(8, 32 // jnp.dtype(dtype).itemsize)


def _row_tile(n_rows, f32_block_bytes, cp, sub):
    """Rows per tile so the f32-expanded block is ~f32_block_bytes."""
    tr = f32_block_bytes // (cp * 4)
    tr = max(sub, (tr // sub) * sub)
    return n_rows if tr >= n_rows else tr


# --------------------------------------------------------------------------
# fused (VMEM-resident) kernel: stats + normalize in one call
# --------------------------------------------------------------------------
def _make_fused_kernel(n_total, cp, c_lane, eps):
    def kernel(gb_ref, x_ref, o_ref):
        x = x_ref[...].astype(jnp.float32)                      # (Nr, Cp)

        # per-column sum, folded across the k lane groups via an XLU roll tree
        s = jnp.sum(x, axis=0, keepdims=True)                   # (1, Cp)
        step = c_lane
        while step < cp:
            s = s + pltpu.roll(s, shift=step, axis=1)
            step *= 2
        mean = s * (1.0 / n_total)                               # per-channel

        # centered (numerically robust) variance, folded the same way
        d = x - mean
        v = jnp.sum(d * d, axis=0, keepdims=True)
        step = c_lane
        while step < cp:
            v = v + pltpu.roll(v, shift=step, axis=1)
            step *= 2
        var = v * (1.0 / n_total)

        inv_std = jax.lax.rsqrt(var + eps)
        scale = gb_ref[0:1, :] * inv_std
        shift = gb_ref[1:2, :] - mean * scale
        o_ref[...] = (x * scale + shift).astype(o_ref.dtype)

    return kernel


# --------------------------------------------------------------------------
# streaming pass 1: per-column sum / sum-of-squares (2-core sharded)
# --------------------------------------------------------------------------
def _make_stats_kernel(nr_valid, tile_rows, blocks_per_core, n_blocks):
    def kernel(x_ref, stats_ref):                 # stats_ref: (8, Cp)
        c = pl.program_id(0)
        i = pl.program_id(1)

        @pl.when(i == 0)
        def _():
            stats_ref[...] = jnp.zeros_like(stats_ref)

        b = c * blocks_per_core + i               # global block id (may overshoot)
        row0 = jnp.minimum(b, n_blocks - 1) * tile_rows
        in_range = b < n_blocks
        is_full = jnp.logical_and(in_range, row0 + tile_rows <= nr_valid)

        x = x_ref[...].astype(jnp.float32)        # (tile_rows, Cp)

        @pl.when(is_full)                         # fast path: no mask
        def _():
            stats_ref[0:1, :] += jnp.sum(x, axis=0, keepdims=True)
            stats_ref[1:2, :] += jnp.sum(x * x, axis=0, keepdims=True)

        @pl.when(jnp.logical_not(is_full))        # partial / overshoot tile
        def _():
            rows = jax.lax.broadcasted_iota(jnp.int32, (tile_rows, 1), 0) + row0
            keep = jnp.logical_and(rows < nr_valid, in_range)
            xm = jnp.where(keep, x, 0.0)
            stats_ref[0:1, :] += jnp.sum(xm, axis=0, keepdims=True)
            stats_ref[1:2, :] += jnp.sum(xm * xm, axis=0, keepdims=True)

    return kernel


# --------------------------------------------------------------------------
# streaming pass 2: y = x * scale + shift
# --------------------------------------------------------------------------
def _norm_kernel(ss_ref, x_ref, o_ref):
    x = x_ref[...].astype(jnp.float32)
    o_ref[...] = (x * ss_ref[0:1, :] + ss_ref[1:2, :]).astype(o_ref.dtype)


# --------------------------------------------------------------------------
# wrapper
# --------------------------------------------------------------------------
def batchnorm1d_transpose(x, gamma, beta, *, eps=EPS,
                          force_streaming=False,
                          stats_tile_rows=None, norm_tile_rows=None):
    """x: (B, T, C). gamma/beta: (C,). Returns (B, T, C)."""
    B, T, C = x.shape
    N = B * T
    itemsize = jnp.dtype(x.dtype).itemsize
    sub = _sublane_multiple(x.dtype)

    # ---- lane-dense layout --------------------------------------------------
    if C % 128 == 0:
        k, c_lane, padded = 1, C, False
    elif C < 128 and 128 % C == 0 and N % (128 // C) == 0:
        k, c_lane, padded = 128 // C, C, False            # fold rows into lanes
    else:
        k, c_lane, padded = 1, ((C + 127) // 128) * 128, True   # pad channels
    cp = k * c_lane
    nr = N // k

    x2d = x.reshape(N, C)
    if padded:
        x2d = jnp.pad(x2d, ((0, 0), (0, c_lane - C)))
    x2d = x2d.reshape(nr, cp)                              # free reinterpretation

    gamma_w = gamma.astype(jnp.float32)
    beta_w = beta.astype(jnp.float32)
    if padded:
        gamma_w = jnp.pad(gamma_w, (0, c_lane - C), constant_values=1.0)
        beta_w = jnp.pad(beta_w, (0, c_lane - C))

    def unfold(out2d):
        out = out2d.reshape(N, c_lane)
        if padded:
            out = out[:, :C]
        return out.reshape(B, T, C)

    vmem_cap = _vmem_capacity_bytes()
    budget = min(vmem_cap // 2, 32 * _MIB)

    # ---- fused fast path: whole problem resident in VMEM ---------------------
    # need ~= x block + out block + two f32 temps of x's extent
    fused_need = nr * cp * (2 * itemsize + 8)
    if not force_streaming and fused_need <= min(vmem_cap // 2, 24 * _MIB):
        gb = jnp.stack([jnp.tile(gamma_w, k), jnp.tile(beta_w, k)], axis=0)
        fused_limit = min(int(fused_need) + 8 * _MIB,
                          max(vmem_cap - 16 * _MIB, 16 * _MIB))
        out2d = pl.pallas_call(
            _make_fused_kernel(N, cp, c_lane, eps),
            out_shape=jax.ShapeDtypeStruct((nr, cp), x.dtype),
            compiler_params=pltpu.CompilerParams(
                vmem_limit_bytes=fused_limit),
        )(gb, x2d)
        return unfold(out2d)

    # ---- streaming two-pass path ---------------------------------------------
    # Pass 1 only streams the input (resident accumulators) -> ~2x the row tile
    # of pass 2 (which double-buffers input AND output blocks).
    b1_f32 = min(6 * _MIB, budget // 4)        # pass-1 f32-expanded block bytes
    b2_f32 = min(3 * _MIB, budget // 8)        # pass-2 f32-expanded block bytes
    tr1 = min(int(stats_tile_rows), nr) if stats_tile_rows else \
        _row_tile(nr, b1_f32, cp, sub)
    tr2 = min(int(norm_tile_rows), nr) if norm_tile_rows else \
        _row_tile(nr, b2_f32, cp, sub)

    # -------- pass 1: sum / sum-of-squares, sharded over 2 TensorCores --------
    n_blocks1 = pl.cdiv(nr, tr1)
    n_cores = 2 if n_blocks1 >= 2 else 1
    bpc = pl.cdiv(n_blocks1, n_cores)
    limit1 = int(4 * b1_f32 + 8 * _MIB)

    stats = pl.pallas_call(
        _make_stats_kernel(nr, tr1, bpc, n_blocks1),
        out_shape=jax.ShapeDtypeStruct((n_cores, 8, cp), jnp.float32),
        grid=(n_cores, bpc),
        in_specs=[pl.BlockSpec(
            (tr1, cp),
            lambda c, i: (jnp.minimum(c * bpc + i, n_blocks1 - 1), 0))],
        out_specs=pl.BlockSpec((None, 8, cp), lambda c, i: (c, 0, 0)),
        compiler_params=pltpu.CompilerParams(
            dimension_semantics=("parallel", "arbitrary"),
            vmem_limit_bytes=limit1),
    )(x2d)

    # -------- tiny C-sized epilogue (plain JAX) --------------------------------
    s8 = stats.sum(axis=0)                                 # (8, Cp)
    sum_c = s8[0].reshape(k, c_lane).sum(axis=0)
    sumsq_c = s8[1].reshape(k, c_lane).sum(axis=0)
    mean = sum_c / N
    var = jnp.maximum(sumsq_c / N - mean * mean, 0.0)      # biased var (training)
    inv_std = jax.lax.rsqrt(var + eps)
    scale_c = gamma_w * inv_std
    shift_c = beta_w - mean * scale_c
    ss = jnp.stack([jnp.tile(scale_c, k), jnp.tile(shift_c, k)], axis=0)  # (2,Cp)

    # -------- pass 2: y = x * scale + shift -------------------------------------
    n_blocks2 = pl.cdiv(nr, tr2)
    limit2 = int(6 * b2_f32 + 8 * _MIB)
    out2d = pl.pallas_call(
        _norm_kernel,
        out_shape=jax.ShapeDtypeStruct((nr, cp), x.dtype),
        grid=(n_blocks2,),
        in_specs=[pl.BlockSpec((2, cp), lambda i: (0, 0)),
                  pl.BlockSpec((tr2, cp), lambda i: (i, 0))],
        out_specs=pl.BlockSpec((tr2, cp), lambda i: (i, 0)),
        compiler_params=pltpu.CompilerParams(
            dimension_semantics=("parallel",),
            vmem_limit_bytes=limit2),
    )(ss, x2d)

    return unfold(out2d)


# --------------------------------------------------------------------------
# pure-JAX reference
# --------------------------------------------------------------------------
def _reference(x, gamma, beta):
    xf = x.astype(jnp.float32)
    mean = jnp.mean(xf, axis=(0, 1), keepdims=True)
    var = jnp.mean((xf - mean) ** 2, axis=(0, 1), keepdims=True)
    return ((xf - mean) / jnp.sqrt(var + EPS) * gamma.astype(jnp.float32)
            + beta.astype(jnp.float32))


if __name__ == "__main__":
    key = jax.random.PRNGKey(0)
    keys = jax.random.split(key, 10)

    # Case 1: default nn.BatchNorm1d init; tiny input -> fused VMEM-resident
    # path with the k=4 lane fold (C=32 -> 128 lanes).
    B, T, C = 2, 8, 32
    x = jax.random.normal(keys[0], (B, T, C), dtype=jnp.float32)
    gamma = jnp.ones((C,), jnp.float32)
    beta = jnp.zeros((C,), jnp.float32)
    out = jax.block_until_ready(batchnorm1d_transpose(x, gamma, beta))
    ref = _reference(x, gamma, beta)
    assert out.shape == (B, T, C)
    assert jnp.allclose(out, ref, atol=1e-4, rtol=1e-4), "case 1 mismatch"

    # Case 2: non-trivial affine, forced streaming path with small tiles ->
    # 2-core pass-1 split, odd block count (one clamped overshoot block) and a
    # masked partial last tile.
    B2, T2, C2 = 2, 46, 32
    x2 = jax.random.normal(keys[1], (B2, T2, C2), dtype=jnp.float32) * 3.0 + 1.5
    g2 = jax.random.normal(keys[2], (C2,), jnp.float32)
    b2 = jax.random.normal(keys[3], (C2,), jnp.float32)
    out2 = jax.block_until_ready(
        batchnorm1d_transpose(x2, g2, b2, force_streaming=True,
                              stats_tile_rows=8, norm_tile_rows=8))
    ref2 = _reference(x2, g2, b2)
    assert jnp.allclose(out2, ref2, atol=1e-4, rtol=1e-4), "case 2 mismatch"

    # Case 3: odd channel count (C=5) -> lane-dense channel-padding path (fused).
    B3, T3, C3 = 2, 8, 5
    x3 = jax.random.normal(keys[4], (B3, T3, C3), dtype=jnp.float32) * 2.0 - 0.7
    g3 = jax.random.normal(keys[5], (C3,), jnp.float32)
    b3 = jax.random.normal(keys[6], (C3,), jnp.float32)
    out3 = jax.block_until_ready(batchnorm1d_transpose(x3, g3, b3))
    ref3 = _reference(x3, g3, b3)
    assert out3.shape == (B3, T3, C3)
    assert jnp.allclose(out3, ref3, atol=1e-4, rtol=1e-4), "case 3 mismatch"

    # Case 4: bf16 input, forced streaming -> dtype-aware (16,128) row tiles.
    B4, T4, C4 = 2, 40, 64
    x4 = (jax.random.normal(keys[7], (B4, T4, C4), dtype=jnp.float32)
          * 1.5 + 0.5).astype(jnp.bfloat16)
    g4 = jax.random.normal(keys[8], (C4,), jnp.float32)
    b4 = jax.random.normal(keys[9], (C4,), jnp.float32)
    out4 = jax.block_until_ready(
        batchnorm1d_transpose(x4, g4, b4, force_streaming=True,
                              stats_tile_rows=16, norm_tile_rows=16))
    ref4 = _reference(x4, g4, b4)
    assert jnp.allclose(out4.astype(jnp.float32), ref4,
                        atol=5e-2, rtol=5e-2), "case 4 mismatch"

    print("KERNEL_OK")
</pallas_src>

<mosaic_0001>
module attributes {stable_mosaic.version = 11 : i64} {
  func.func @kernel(%arg0: memref<2x128xf32, #tpu.memory_space<vmem>>, %arg1: memref<4x128xf32, #tpu.memory_space<vmem>>, %arg2: memref<4x128xf32, #tpu.memory_space<vmem>>) attributes {dimension_semantics = [], scalar_prefetch = 0 : i64, scratch_operands = 0 : i64, tpu.core_type = #tpu.core_type<tc>} {
    %c0 = arith.constant 0 : index
    %c0_0 = arith.constant 0 : index
    %0 = vector.load %arg1[%c0, %c0_0] : memref<4x128xf32, #tpu.memory_space<vmem>>, vector<4x128xf32>
    %cst = arith.constant dense<0.000000e+00> : vector<128xf32>
    %1 = vector.multi_reduction <add>, %0, %cst [0] : vector<4x128xf32> to vector<128xf32>
    %2 = vector.shape_cast %1 : vector<128xf32> to vector<1x128xf32>
    %c32_i32 = arith.constant 32 : i32
    %3 = tpu.dynamic_rotate %2 by %c32_i32 dim 1 : vector<1x128xf32>, i32 -> vector<1x128xf32>
    %4 = arith.addf %2, %3 : vector<1x128xf32>
    %c64_i32 = arith.constant 64 : i32
    %5 = tpu.dynamic_rotate %4 by %c64_i32 dim 1 : vector<1x128xf32>, i32 -> vector<1x128xf32>
    %6 = arith.addf %4, %5 : vector<1x128xf32>
    %cst_1 = arith.constant 6.250000e-02 : f32
    %7 = vector.broadcast %cst_1 : f32 to vector<1x128xf32>
    %8 = arith.mulf %6, %7 : vector<1x128xf32>
    %9 = vector.broadcast %8 : vector<1x128xf32> to vector<4x128xf32>
    %10 = arith.subf %0, %9 : vector<4x128xf32>
    %11 = arith.mulf %10, %10 : vector<4x128xf32>
    %cst_2 = arith.constant dense<0.000000e+00> : vector<128xf32>
    %12 = vector.multi_reduction <add>, %11, %cst_2 [0] : vector<4x128xf32> to vector<128xf32>
    %13 = vector.shape_cast %12 : vector<128xf32> to vector<1x128xf32>
    %c32_i32_3 = arith.constant 32 : i32
    %14 = tpu.dynamic_rotate %13 by %c32_i32_3 dim 1 : vector<1x128xf32>, i32 -> vector<1x128xf32>
    %15 = arith.addf %13, %14 : vector<1x128xf32>
    %c64_i32_4 = arith.constant 64 : i32
    %16 = tpu.dynamic_rotate %15 by %c64_i32_4 dim 1 : vector<1x128xf32>, i32 -> vector<1x128xf32>
    %17 = arith.addf %15, %16 : vector<1x128xf32>
    %cst_5 = arith.constant 6.250000e-02 : f32
    %18 = vector.broadcast %cst_5 : f32 to vector<1x128xf32>
    %19 = arith.mulf %17, %18 : vector<1x128xf32>
    %cst_6 = arith.constant 9.99999974E-6 : f32
    %20 = vector.broadcast %cst_6 : f32 to vector<1x128xf32>
    %21 = arith.addf %19, %20 : vector<1x128xf32>
    %22 = math.rsqrt %21 : vector<1x128xf32>
    %c0_7 = arith.constant 0 : index
    %c0_8 = arith.constant 0 : index
    %23 = vector.load %arg0[%c0_7, %c0_8] : memref<2x128xf32, #tpu.memory_space<vmem>>, vector<1x128xf32>
    %24 = arith.mulf %23, %22 : vector<1x128xf32>
    %c1 = arith.constant 1 : index
    %c0_9 = arith.constant 0 : index
    %25 = vector.load %arg0[%c1, %c0_9] : memref<2x128xf32, #tpu.memory_space<vmem>>, vector<1x128xf32>
    %26 = arith.mulf %8, %24 : vector<1x128xf32>
    %27 = arith.subf %25, %26 : vector<1x128xf32>
    %28 = vector.broadcast %24 : vector<1x128xf32> to vector<4x128xf32>
    %29 = arith.mulf %0, %28 : vector<4x128xf32>
    %30 = vector.broadcast %27 : vector<1x128xf32> to vector<4x128xf32>
    %31 = arith.addf %29, %30 : vector<4x128xf32>
    %c0_10 = arith.constant 0 : index
    %c0_11 = arith.constant 0 : index
    %32 = vector.load %arg2[%c0_10, %c0_11] : memref<4x128xf32, #tpu.memory_space<vmem>>, vector<4x128xf32>
    tpu.vector_store %arg2[%c0_10, %c0_11], %31 {strides = array<i32>} : memref<4x128xf32, #tpu.memory_space<vmem>>, vector<4x128xf32>,
    return
  }
}

</mosaic_0001>

<llo_original>
// kernel: tpu_custom_call.1
$region0: #{tpu_custom_call.1}
  #allocation0 [shape = 'u32[]', space=smem, size = 0x4, offset = 0x4, fixed_abs, tag = 'smem constant byte address 0x4 - core index']
  #allocation1 [shape = 'u32[144,128]{1,0:T(1,128)}', space=vmem, size = 0x12000, scoped, tag = 'internal scratch']
  %s0 = inlined_call_operand.hbm [shape: f32[2,128], index: 0, kind: input, shape index: {}]
  %s1 = inlined_call_operand.hbm [shape: f32[4,128], index: 1, kind: input, shape index: {}]
  %s2 = inlined_call_operand.hbm [shape: f32[4,128], index: 2, kind: output, shape index: {}]
  %s3 = sld [smem:[#allocation0]]
  $region26: #{tpu_custom_call.1} parent=0
    _
  %s5 = ssub.s32 1, %s3
  %s6 = scalar_select 0, %s5, %s3
  $region1: #{tpu_custom_call.1} parent=0
    #allocation2 [shape = 'u8[1024]{0}', space=vmem, size = 0x400, scoped, tag = 'input window, operand 0, single buffered']
    #allocation3 [shape = 's32[1]{0}', space=sflag, size = 0x4, scoped, tag = 'scoped memory for tpu_custom_call.1']
    #allocation4 [shape = 's32[1]{0}', space=sflag, size = 0x4, scoped, tag = 'scoped memory for tpu_custom_call.1']
    #allocation5 [shape = 'u8[2048]{0}', space=vmem, size = 0x800, scoped, tag = 'input window, operand 1, single buffered']
    #allocation6 [shape = 's32[1]{0}', space=sflag, size = 0x4, scoped, tag = 'scoped memory for tpu_custom_call.1']
    #allocation7 [shape = 'u8[2048]{0}', space=vmem, size = 0x800, scoped, tag = 'output window, operand 0, single buffered']
    %7 = vsyncpa [#allocation3], 0
    %8 = vsyncpa [#allocation6], 0
    %9 = vsyncpa [#allocation4], 0
    // Predicated region
    $region2: #{tpu_custom_call.1} parent=1 // pred_check
      _
    $region3: #{tpu_custom_call.1} parent=1 // pred_check_branch
      %11 = sbr.rel (0) target = $region5
    $region4: #{tpu_custom_call.1} parent=1 // pred_region
      %s13 = ssub.s32 32, 32
      %14 = vsyncadd [#allocation3], %s13
      %s16 = sshll.u32 [#allocation2], 4
      %s17 = int_to_ptr.vmem [resolvable:$true] %s16
      %19 = dma.hbm_to_vmem [thread:$0]  %s0, 32, %s17, [#allocation3]
    $region5: #{tpu_custom_call.1} parent=1 // pred_fallthru
      _
    // Predicated region
    $region6: #{tpu_custom_call.1} parent=1 // pred_check
      _
    $region7: #{tpu_custom_call.1} parent=1 // pred_check_branch
      %21 = sbr.rel (0) target = $region9
    $region8: #{tpu_custom_call.1} parent=1 // pred_region
      %s23 = ssub.s32 64, 64
      %24 = vsyncadd [#allocation6], %s23
      %s26 = sshll.u32 [#allocation5], 4
      %s27 = int_to_ptr.vmem [resolvable:$true] %s26
      %29 = dma.hbm_to_vmem [thread:$0]  %s1, 64, %s27, [#allocation6]
    $region9: #{tpu_custom_call.1} parent=1 // pred_fallthru
      _
    // Predicated region
    $region10: #{tpu_custom_call.1} parent=1 // pred_check
      _
    $region11: #{tpu_custom_call.1} parent=1 // pred_check_branch
      %31 = sbr.rel (0) target = $region13
    $region12: #{tpu_custom_call.1} parent=1 // pred_region
      %32 = dma.done [#allocation3], 32
    $region13: #{tpu_custom_call.1} parent=1 // pred_fallthru
      _
    // Predicated region
    $region14: #{tpu_custom_call.1} parent=1 // pred_check
      _
    $region15: #{tpu_custom_call.1} parent=1 // pred_check_branch
      %34 = sbr.rel (0) target = $region17
    $region16: #{tpu_custom_call.1} parent=1 // pred_region
      %35 = dma.done [#allocation6], 64
    $region17: #{tpu_custom_call.1} parent=1 // pred_fallthru
      _
    %v36 = vld [vmem:[#allocation5] sm:$0xf]
    %vm37 = vcmask 1043456
    %v38 = vsel %vm37, %v36, 0.0
    %v39 = vrot.slane %v38, 4
    %v40 = vadd.f32 %v38, %v39
    %v41 = vrot.slane %v40, 2
    %v42 = vadd.f32 %v40, %v41
    %v43 = vrot.slane %v42, 1
    %v44 = vadd.f32 %v42, %v43
    %45 = vrot.lane.b32.xlu0 %v44, 32
    %v46 = vpop.permute.xlu0 %45
    %v47 = vadd.f32 %v44, %v46
    %48 = vrot.lane.b32.xlu0 %v47, 64
    %v49 = vpop.permute.xlu0 %48
    %v50 = vadd.f32 %v47, %v49
    %v51 = vmul.f32 %v50, 0.0625
    %v52 = vlaneseq
    %v53 = vshrl.u32 %v52, 7
    %v54 = vsub.s32 0, %v53
    %v55 = vrot.slane %v51, %v54
    %v56 = vsub.f32 %v36, %v55
    %v57 = vmul.f32 %v56, %v56
    %v58 = vsel %vm37, %v57, 0.0
    %v59 = vrot.slane %v58, 4
    %v60 = vadd.f32 %v58, %v59
    %v61 = vrot.slane %v60, 2
    %v62 = vadd.f32 %v60, %v61
    %v63 = vrot.slane %v62, 1
    %v64 = vadd.f32 %v62, %v63
    %65 = vrot.lane.b32.xlu0 %v64, 32
    %v66 = vpop.permute.xlu0 %65
    %v67 = vadd.f32 %v64, %v66
    %68 = vrot.lane.b32.xlu0 %v67, 64
    %v69 = vpop.permute.xlu0 %68
    %v70 = vadd.f32 %v67, %v69
    %v71 = vmul.f32 %v70, 0.0625
    %v72 = vadd.f32 %v71, 1e-05
    %v73 = vrsqrt.pop %v72
    %v74 = vld [vmem:[#allocation2] sm:$0x1]
    %v75 = vmul.f32 %v74, %v73
    %v76 = vld [vmem:[#allocation2 + $0x1] sm:$0x1]
    %v77 = vmul.f32 %v51, %v75
    %v78 = vsub.f32 %v76, %v77
    %v79 = vlaneseq
    %v80 = vshrl.u32 %v79, 7
    %v81 = vsub.s32 0, %v80
    %v82 = vrot.slane %v75, %v81
    %v83 = vmul.f32 %v36, %v82
    %v84 = vlaneseq
    %v85 = vshrl.u32 %v84, 7
    %v86 = vsub.s32 0, %v85
    %v87 = vrot.slane %v78, %v86
    %v88 = vadd.f32 %v83, %v87
    %89 = vst [vmem:[#allocation7] sm:$0xf] %v88
    // Predicated region
    $region18: #{tpu_custom_call.1} parent=1 // pred_check
      _
    $region19: #{tpu_custom_call.1} parent=1 // pred_check_branch
      %91 = sbr.rel (0) target = $region21
    $region20: #{tpu_custom_call.1} parent=1 // pred_region
      %s93 = ssub.s32 64, 64
      %94 = vsyncadd [#allocation4], %s93
      %s96 = sshll.u32 [#allocation7], 4
      %s97 = int_to_ptr.vmem [resolvable:$true] %s96
      %99 = dma.vmem_to_hbm [thread:$0]  %s97, 64, %s2, [#allocation4]
    $region21: #{tpu_custom_call.1} parent=1 // pred_fallthru
      _
    // Predicated region
    $region22: #{tpu_custom_call.1} parent=1 // pred_check
      _
    $region23: #{tpu_custom_call.1} parent=1 // pred_check_branch
      %101 = sbr.rel (0) target = $region25
    $region24: #{tpu_custom_call.1} parent=1 // pred_region
      %102 = dma.done [#allocation4], 64
    $region25: #{tpu_custom_call.1} parent=1 // pred_fallthru
      _
    %103 = vsyncpa [#allocation3], 1
    %104 = vsyncpa [#allocation6], 1
    %105 = vsyncpa [#allocation4], 1

</llo_original>
